<compile_context>
chip_gen: v7x
topology: tpu7x:2x2x1
jax: 0.10.0
libtpu: 0.0.40
codegen_flags: <defaults>
</compile_context>

<pallas_src>
import functools
import math

import jax
import jax.numpy as jnp
from jax.experimental import pallas as pl
from jax.experimental.pallas import tpu as pltpu

TM_MAX = 512   # max row tile over flattened (B * H_out * W_out) pixels
LANE = 128     # feature / output slabs are zero-padded to a multiple of this
VMEM_STREAM_BUDGET = 40 << 20   # budget for double-buffered streamed blocks (v7x-safe)


def _round_up(n, m):
    return ((n + m - 1) // m) * m


def _nbytes(shape, dtype):
    return int(math.prod(shape)) * jnp.dtype(dtype).itemsize


# --------------------------------------------------------------------------- #
# Capability probe: single-buffered resident inputs via pipeline_mode
# --------------------------------------------------------------------------- #
_BUFFERED_OK = None


def _single_buffer_ok():
    """Probe once whether pipeline_mode=pl.Buffered(1) lowers on this jax build."""
    global _BUFFERED_OK
    if _BUFFERED_OK is None:
        try:
            def kern(x_ref, w_ref, o_ref):
                o_ref[...] = x_ref[...] + w_ref[...]

            z = jnp.zeros((16, 128), jnp.float32)
            w = jnp.zeros((8, 128), jnp.float32)
            out = pl.pallas_call(
                kern,
                out_shape=jax.ShapeDtypeStruct((16, 128), jnp.float32),
                grid=(2,),
                in_specs=[pl.BlockSpec((8, 128), lambda i: (i, 0)),
                          pl.BlockSpec((8, 128), lambda i: (0, 0),
                                       pipeline_mode=pl.Buffered(1))],
                out_specs=pl.BlockSpec((8, 128), lambda i: (i, 0)),
            )(z, w)
            jax.block_until_ready(out)
            _BUFFERED_OK = True
        except Exception:
            _BUFFERED_OK = False
    return _BUFFERED_OK


# --------------------------------------------------------------------------- #
# Pallas kernel: one fused Lorentz conv stage (optionally + fused residual)
# --------------------------------------------------------------------------- #
def _stage_kernel(*refs, kk, k, apply_relu, residual):
    it = iter(refs)
    patch_ref = next(it)
    w_ref = next(it)
    wt_ref = next(it) if kk > 1 else None
    res_ref = next(it) if residual == "add" else None
    if residual == "matmul":
        sc_ref = next(it)
        sw_ref = next(it)
    out_ref = next(it)

    inv_k = 1.0 / k
    origin_t = inv_k ** 0.5            # Lorentz origin time 1/sqrt(k)

    patch = patch_ref[...]                                     # (TM, F_pad) bf16

    # ---- LorentzFullyConnected (bias=False): space output columns only, on the MXU.
    #      W is pre-packed so y lands in the [0 | space | 0pad] layout.  For kk == 1 the
    #      Lorentz window-time rescale is the identity (t_res == t), so the time-feature
    #      row is already folded into row 0 of W -> no VPU epilogue at all.
    y = jnp.dot(patch, w_ref[...], preferred_element_type=jnp.float32)   # (TM, C_pad)

    if kk > 1:
        # LorentzConv2d direct concatenation of the kk window time columns; spatial
        # zero padding is handled by clamping at the origin time.
        pt = jnp.maximum(patch[:, :kk].astype(jnp.float32), origin_t)
        t2 = jnp.sum(pt * pt, axis=-1, keepdims=True) - (kk - 1.0) * inv_k
        t_res = jnp.sqrt(jnp.maximum(t2, 1e-8))                # (TM, 1)
        y = y + t_res * wt_ref[...]                            # cheap VPU broadcast

    # ---- LorentzBatchNorm2d (eval mode, __init__ buffers) == identity: elided.

    # ---- residual merge (space only): the residual term's time column is zero by
    #      construction, so a plain add suffices (no iota / where masking).
    if residual == "add":
        y = y + res_ref[...].astype(jnp.float32)
    elif residual == "matmul":
        # projection shortcut fused in: second MXU matmul over the same row tile
        y = y + jnp.dot(sc_ref[...], sw_ref[...], preferred_element_type=jnp.float32)

    if apply_relu:
        y = jnp.maximum(y, 0.0)                                # LorentzReLU on space

    # ---- manifold.add_time: col 0 and all pad cols of y are exactly zero, so the
    #      full-row reduction equals ||space||^2.
    t = jnp.sqrt(jnp.sum(y * y, axis=-1, keepdims=True) + inv_k)
    col = jax.lax.broadcasted_iota(jnp.int32, y.shape, dimension=1)
    out_ref[...] = jnp.where(col == 0, t, y).astype(out_ref.dtype)


# --------------------------------------------------------------------------- #
# pallas_call wrapper for one stage
# --------------------------------------------------------------------------- #
def _lorentz_stage(patches, conv, *, k, apply_relu, tm, res=None, shortcut=None,
                   out_dtype=jnp.bfloat16):
    Np, F_pad = patches.shape
    w, wt, kk = conv["w"], conv["wt"], conv["kk"]
    C_pad = w.shape[1]
    assert Np % tm == 0 and F_pad == w.shape[0]

    residual = None
    if shortcut is not None:
        residual = "matmul"
        sc_in, sc_conv = shortcut
        sw = sc_conv["w"]
        assert sc_in.shape == (Np, sw.shape[0]) and sw.shape[1] == C_pad
    elif res is not None:
        residual = "add"
        assert res.shape == (Np, C_pad)

    # resident (grid-invariant) inputs: single-buffer when the jax build supports it
    res_kw = {"pipeline_mode": pl.Buffered(1)} if _single_buffer_ok() else {}
    w_bufs = 1 if res_kw else 2

    in_specs = [pl.BlockSpec((tm, F_pad), lambda i: (i, 0)),              # patch slab
                pl.BlockSpec((F_pad, C_pad), lambda i: (0, 0), **res_kw)]  # packed weight
    args = [patches, w]
    if kk > 1:
        in_specs.append(pl.BlockSpec((1, C_pad), lambda i: (0, 0), **res_kw))
        args.append(wt)
    if residual == "add":
        in_specs.append(pl.BlockSpec((tm, C_pad), lambda i: (i, 0)))
        args.append(res)
    elif residual == "matmul":
        in_specs.append(pl.BlockSpec((tm, sw.shape[0]), lambda i: (i, 0)))
        in_specs.append(pl.BlockSpec((sw.shape[0], C_pad), lambda i: (0, 0), **res_kw))
        args.extend([sc_in, sw])

    # ---- VMEM accounting: double-buffered streamed blocks + resident weights + f32
    #      epilogue temporaries.  Never set the limit below the 32 MiB default.
    est = 2 * _nbytes((tm, F_pad), patches.dtype)
    est += 2 * _nbytes((tm, C_pad), out_dtype)
    est += w_bufs * _nbytes(w.shape, w.dtype)
    if kk > 1:
        est += w_bufs * _nbytes(wt.shape, wt.dtype)
    if residual == "add":
        est += 2 * _nbytes((tm, C_pad), res.dtype)
    elif residual == "matmul":
        est += 2 * _nbytes((tm, sw.shape[0]), sc_in.dtype)
        est += w_bufs * _nbytes(sw.shape, sw.dtype)
    est += 2 * _nbytes((tm, C_pad), jnp.float32)
    vmem_limit = int(min(100 << 20, max(32 << 20, 2 * est)))

    kernel = functools.partial(_stage_kernel, kk=kk, k=k,
                               apply_relu=apply_relu, residual=residual)

    return pl.pallas_call(
        kernel,
        out_shape=jax.ShapeDtypeStruct((Np, C_pad), out_dtype),
        grid=(Np // tm,),
        in_specs=in_specs,
        out_specs=pl.BlockSpec((tm, C_pad), lambda i: (i, 0)),
        compiler_params=pltpu.CompilerParams(
            dimension_semantics=("parallel",),
            vmem_limit_bytes=vmem_limit),
    )(*args)


# --------------------------------------------------------------------------- #
# JAX glue: slab packing, im2col for the 3x3 conv, parameter init
# --------------------------------------------------------------------------- #
def _pad_slab(a, n_rows, n_cols, dtype=jnp.bfloat16):
    out = jnp.zeros((n_rows, n_cols), dtype)
    return out.at[:a.shape[0], :a.shape[1]].set(a.astype(dtype))


def _extract_patches_3x3(x, *, stride, padding):
    """3x3 im2col (kernel-major space order), returns [time cols (9) | space cols (9*Cs)]."""
    B, H, W, c = x.shape
    Ho = (H + 2 * padding - 3) // stride + 1
    Wo = (W + 2 * padding - 3) // stride + 1
    xp = jnp.pad(x, ((0, 0), (padding, padding), (padding, padding), (0, 0)))
    t_list, s_list = [], []
    for kh in range(3):
        for kw in range(3):
            win = xp[:, kh:kh + stride * Ho:stride, kw:kw + stride * Wo:stride, :]
            t_list.append(win[..., :1])
            s_list.append(win[..., 1:])
    slab = jnp.concatenate(t_list + s_list, axis=-1)          # (B, Ho, Wo, 9*c)
    return slab.reshape(B * Ho * Wo, 9 * c), Ho, Wo


def _init_conv(key, in_ch_l, out_ch_l, ksize):
    """LorentzConv2d.reset_parameters + pre-packing into padded, MXU-friendly slabs.

    Raw LFC weight w: (1 + kk*Cs, out_ch_l); row 0 multiplies the rescaled window time,
    rows 1.. multiply the space patches (kernel-major order; equivalent reparametrization
    of torch's channel-major Unfold since the weight is i.i.d. initialized here).  Only
    the space output columns w[:, 1:] are used: the LFC discards its raw time column and
    recomputes time with add_time.  For ksize == 1 the window-time rescale is the
    identity, so the time row folds directly into MXU weight row 0 (no wt broadcast).
    """
    kk = ksize * ksize
    cs = in_ch_l - 1
    stdv = math.sqrt(2.0 / (cs * kk))
    w = jax.random.uniform(key, (1 + cs * kk, out_ch_l),
                           minval=-stdv, maxval=stdv, dtype=jnp.float32)
    f_pad = _round_up(kk + kk * cs, LANE)
    c_pad = _round_up(out_ch_l, LANE)
    w_pad = jnp.zeros((f_pad, c_pad), jnp.float32)
    w_pad = w_pad.at[kk:kk + kk * cs, 1:out_ch_l].set(w[1:, 1:])
    if kk == 1:
        w_pad = w_pad.at[0, 1:out_ch_l].set(w[0, 1:])          # fold time row into MXU
        wt_pad = None
    else:
        wt_pad = jnp.zeros((1, c_pad), jnp.float32).at[:, 1:out_ch_l].set(w[0:1, 1:])
    return {"w": w_pad.astype(jnp.bfloat16), "wt": wt_pad, "kk": kk, "c_out": out_ch_l}


def init_lorentz_bottleneck(key, in_channels, out_channels, stride):
    expansion = 4
    keys = jax.random.split(key, 4)
    params = {
        "conv1": _init_conv(keys[0], in_channels + 1, out_channels + 1, 1),
        "conv2": _init_conv(keys[1], out_channels + 1, out_channels + 1, 3),
        "conv3": _init_conv(keys[2], out_channels + 1, out_channels * expansion + 1, 1),
    }
    if stride != 1 or in_channels != out_channels * expansion:
        params["shortcut"] = _init_conv(keys[3], in_channels + 1,
                                        out_channels * expansion + 1, 1)
    else:
        params["shortcut"] = None
    return params


def _choose_tm(n_rows, worst_row_bytes, *, max_tm=TM_MAX, budget=VMEM_STREAM_BUDGET):
    """>= ~4 grid steps over the smallest stage; shrink until streamed VMEM fits budget."""
    tm = min(max_tm, _round_up(max(n_rows // 4, 8), 8))
    while tm > 8 and tm * worst_row_bytes > budget:
        tm = max(8, _round_up(tm // 2, 8))
    return tm


def lorentz_bottleneck_forward(x, params, *, stride, k=1.0):
    """x: (B, H, W, in_channels+1), valid Lorentz points per pixel (time at index 0)."""
    B, H, W, c_in = x.shape
    c1 = params["conv1"]["c_out"]
    c3 = params["conv3"]["c_out"]

    F_in_pad, C_pad1 = params["conv1"]["w"].shape
    F_pad2, C_pad2 = params["conv2"]["w"].shape
    C_pad3 = params["conv3"]["w"].shape[1]

    Ho = (H + 2 - 3) // stride + 1
    Wo = (W + 2 - 3) // stride + 1
    N1, N2 = B * H * W, B * Ho * Wo

    # adaptive row tile shared by all stages (streamed bf16 blocks x2 + f32 temps x2)
    worst_row_bytes = max(
        2 * 2 * F_in_pad + 2 * 2 * C_pad1 + 2 * 4 * C_pad1,                      # conv1
        2 * 2 * F_pad2 + 2 * 2 * C_pad2 + 2 * 4 * C_pad2,                        # conv2
        2 * 2 * C_pad2 + 2 * 2 * max(F_in_pad, C_pad3) + 2 * 2 * C_pad3 + 2 * 4 * C_pad3,
    )
    tm = _choose_tm(min(N1, N2), worst_row_bytes)
    Np1 = _round_up(N1, tm)
    Np2 = _round_up(N2, tm)

    # ---- conv1 (1x1, stride 1) + BN + ReLU : patch slab == the input itself
    p1 = _pad_slab(x.reshape(N1, c_in), Np1, F_in_pad)
    o1 = _lorentz_stage(p1, params["conv1"], k=k, apply_relu=True, tm=tm)  # (Np1, C_pad1)

    # ---- conv2 (3x3, stride, pad 1) + BN + ReLU : im2col in XLA (see TODO above)
    x1 = o1[:N1, :c1].reshape(B, H, W, c1)
    p2_raw, Ho, Wo = _extract_patches_3x3(x1, stride=stride, padding=1)
    p2 = _pad_slab(p2_raw, Np2, F_pad2)
    o2 = _lorentz_stage(p2, params["conv2"], k=k, apply_relu=True, tm=tm)  # (Np2, C_pad2)

    # ---- conv3 (1x1) + BN, fused with the residual branch + add_time + LorentzReLU.
    #      Patch slab for this 1x1 conv is exactly conv2's output slab (no repack).
    if params["shortcut"] is not None:
        # projection shortcut fused into the conv3 kernel (no HBM round trip for res)
        xs = _pad_slab(x[:, ::stride, ::stride, :].reshape(N2, c_in), Np2, F_in_pad)
        out = _lorentz_stage(o2, params["conv3"], k=k, apply_relu=True, tm=tm,
                             shortcut=(xs, params["shortcut"]))            # (Np2, C_pad3)
    else:
        assert stride == 1 and c_in == c3
        # identity shortcut: stream only the space columns (time col 0 left zero), bf16
        res = jnp.zeros((Np2, C_pad3), jnp.bfloat16)
        res = res.at[:N2, 1:c3].set(x.reshape(N2, c_in)[:, 1:].astype(jnp.bfloat16))
        out = _lorentz_stage(o2, params["conv3"], k=k, apply_relu=True, tm=tm, res=res)

    return out[:N2, :c3].reshape(B, Ho, Wo, c3)       # bf16 (next block consumes bf16)


# --------------------------------------------------------------------------- #
if __name__ == "__main__":
    key = jax.random.PRNGKey(0)
    k_curv = 1.0

    def make_input(kk, B, H, W, c_space):
        s = 0.5 * jax.random.normal(kk, (B, H, W, c_space), dtype=jnp.float32)
        t = jnp.sqrt(jnp.sum(s * s, axis=-1, keepdims=True) + 1.0 / k_curv)
        return jnp.concatenate([t, s], axis=-1)

    k1, k2, k3, k4 = jax.random.split(key, 4)
    B, H, W = 2, 8, 8

    # Case 1: projection shortcut (stride 2, in_channels != out_channels * 4)
    in_ch, out_ch, stride = 8, 4, 2
    x = make_input(k1, B, H, W, in_ch)                                 # (2, 8, 8, 9)
    params = init_lorentz_bottleneck(k2, in_ch, out_ch, stride)
    out = jax.block_until_ready(
        lorentz_bottleneck_forward(x, params, stride=stride, k=k_curv))
    assert out.shape == (B, H // stride, W // stride, out_ch * 4 + 1), out.shape
    assert bool(jnp.all(jnp.isfinite(out.astype(jnp.float32))))

    # Case 2: identity shortcut (stride 1, in_channels == out_channels * 4)
    in_ch2, out_ch2, stride2 = 16, 4, 1
    x2 = make_input(k3, B, H, W, in_ch2)                               # (2, 8, 8, 17)
    params2 = init_lorentz_bottleneck(k4, in_ch2, out_ch2, stride2)
    out2 = jax.block_until_ready(
        lorentz_bottleneck_forward(x2, params2, stride=stride2, k=k_curv))
    assert out2.shape == (B, H, W, out_ch2 * 4 + 1), out2.shape
    assert bool(jnp.all(jnp.isfinite(out2.astype(jnp.float32))))

    print("KERNEL_OK")
</pallas_src>

<mosaic_0001>
module attributes {stable_mosaic.version = 11 : i64} {
  func.func @kern(%arg0: i32, %arg1: memref<8x128xf32, #tpu.memory_space<vmem>>, %arg2: memref<8x128xf32, #tpu.memory_space<vmem>>, %arg3: memref<8x128xf32, #tpu.memory_space<vmem>>) attributes {dimension_semantics = [#tpu.dimension_semantics<arbitrary>], iteration_bounds = array<i64: 2>, scalar_prefetch = 0 : i64, scratch_operands = 0 : i64, tpu.core_type = #tpu.core_type<tc>, window_params = [{transform_indices = @transform_0, window_bounds = array<i64: 8, 128>}, {pipeline_mode = #tpu.pipeline_mode<synchronous>, transform_indices = @transform_1, window_bounds = array<i64: 8, 128>}, {transform_indices = @transform_2, window_bounds = array<i64: 8, 128>}]} {
    %c0 = arith.constant 0 : index
    %c0_0 = arith.constant 0 : index
    %0 = vector.load %arg1[%c0, %c0_0] : memref<8x128xf32, #tpu.memory_space<vmem>>, vector<8x128xf32>
    %c0_1 = arith.constant 0 : index
    %c0_2 = arith.constant 0 : index
    %1 = vector.load %arg2[%c0_1, %c0_2] : memref<8x128xf32, #tpu.memory_space<vmem>>, vector<8x128xf32>
    %2 = arith.addf %0, %1 : vector<8x128xf32>
    %c0_3 = arith.constant 0 : index
    %c0_4 = arith.constant 0 : index
    %3 = vector.load %arg3[%c0_3, %c0_4] : memref<8x128xf32, #tpu.memory_space<vmem>>, vector<8x128xf32>
    tpu.vector_store %arg3[%c0_3, %c0_4], %2 {strides = array<i32>} : memref<8x128xf32, #tpu.memory_space<vmem>>, vector<8x128xf32>,
    return
  }
  func.func @transform_0(%arg0: i32) -> (i32, i32) {
    %c0_i32 = arith.constant 0 : i32
    %c0_i32_0 = arith.constant 0 : i32
    return %arg0, %c0_i32 : i32, i32
  }
  func.func @transform_1(%arg0: i32) -> (i32, i32) {
    %c0_i32 = arith.constant 0 : i32
    %c0_i32_0 = arith.constant 0 : i32
    %c0_i32_1 = arith.constant 0 : i32
    return %c0_i32, %c0_i32_0 : i32, i32
  }
  func.func @transform_2(%arg0: i32) -> (i32, i32) {
    %c0_i32 = arith.constant 0 : i32
    %c0_i32_0 = arith.constant 0 : i32
    return %arg0, %c0_i32 : i32, i32
  }
}

module attributes {stable_mosaic.version = 11 : i64} {
  func.func @_stage_kernel(%arg0: i32, %arg1: memref<8x128xbf16, #tpu.memory_space<vmem>>, %arg2: memref<128x128xbf16, #tpu.memory_space<vmem>>, %arg3: memref<8x128xbf16, #tpu.memory_space<vmem>>) attributes {dimension_semantics = [#tpu.dimension_semantics<parallel>], iteration_bounds = array<i64: 16>, scalar_prefetch = 0 : i64, scratch_operands = 0 : i64, tpu.core_type = #tpu.core_type<tc>, window_params = [{transform_indices = @transform_0, window_bounds = array<i64: 8, 128>}, {pipeline_mode = #tpu.pipeline_mode<synchronous>, transform_indices = @transform_1, window_bounds = array<i64: 128, 128>}, {transform_indices = @transform_2, window_bounds = array<i64: 8, 128>}]} {
    %c0 = arith.constant 0 : index
    %c0_0 = arith.constant 0 : index
    %0 = vector.load %arg1[%c0, %c0_0] : memref<8x128xbf16, #tpu.memory_space<vmem>>, vector<8x128xbf16>
    %c0_1 = arith.constant 0 : index
    %c0_2 = arith.constant 0 : index
    %1 = vector.load %arg2[%c0_1, %c0_2] : memref<128x128xbf16, #tpu.memory_space<vmem>>, vector<128x128xbf16>
    %cst = arith.constant dense<0.000000e+00> : vector<8x128xf32>
    %2 = tpu.matmul %0, %1, %cst {dimension_numbers = #tpu.dot_dimension_numbers<[1], [0], [0], [1], [0, 0, 1, 1], [], []>} : vector<8x128xbf16>, vector<128x128xbf16>, vector<8x128xf32> -> vector<8x128xf32>
    %cst_3 = arith.constant 0.000000e+00 : f32
    %3 = vector.broadcast %cst_3 : f32 to vector<8x128xf32>
    %4 = arith.maximumf %2, %3 : vector<8x128xf32>
    %5 = arith.mulf %4, %4 : vector<8x128xf32>
    %cst_4 = arith.constant dense<0.000000e+00> : vector<8xf32>
    %6 = vector.multi_reduction <add>, %5, %cst_4 [1] : vector<8x128xf32> to vector<8xf32>
    %7 = vector.shape_cast %6 : vector<8xf32> to vector<8x1xf32>
    %cst_5 = arith.constant 1.000000e+00 : f32
    %8 = vector.broadcast %cst_5 : f32 to vector<8x1xf32>
    %9 = arith.addf %7, %8 : vector<8x1xf32>
    %10 = math.sqrt %9 : vector<8x1xf32>
    %11 = tpu.iota {dimensions = array<i32: 1>} : vector<8x128xi32>
    %c0_i32 = arith.constant 0 : i32
    %12 = vector.broadcast %c0_i32 : i32 to vector<8x128xi32>
    %13 = arith.cmpi eq, %11, %12 : vector<8x128xi32>
    %14 = vector.shape_cast %10 : vector<8x1xf32> to vector<8x1xf32>
    %15 = vector.broadcast %14 : vector<8x1xf32> to vector<8x128xf32>
    %16 = arith.select %13, %15, %4 : vector<8x128xi1>, vector<8x128xf32>
    %17 = arith.truncf %16 : vector<8x128xf32> to vector<8x128xbf16>
    %c0_6 = arith.constant 0 : index
    %c0_7 = arith.constant 0 : index
    %18 = vector.load %arg3[%c0_6, %c0_7] : memref<8x128xbf16, #tpu.memory_space<vmem>>, vector<8x128xbf16>
    tpu.vector_store %arg3[%c0_6, %c0_7], %17 {strides = array<i32>} : memref<8x128xbf16, #tpu.memory_space<vmem>>, vector<8x128xbf16>,
    return
  }
  func.func @transform_0(%arg0: i32) -> (i32, i32) {
    %c0_i32 = arith.constant 0 : i32
    %c0_i32_0 = arith.constant 0 : i32
    return %arg0, %c0_i32 : i32, i32
  }
  func.func @transform_1(%arg0: i32) -> (i32, i32) {
    %c0_i32 = arith.constant 0 : i32
    %c0_i32_0 = arith.constant 0 : i32
    %c0_i32_1 = arith.constant 0 : i32
    return %c0_i32, %c0_i32_0 : i32, i32
  }
  func.func @transform_2(%arg0: i32) -> (i32, i32) {
    %c0_i32 = arith.constant 0 : i32
    %c0_i32_0 = arith.constant 0 : i32
    return %arg0, %c0_i32 : i32, i32
  }
}

</mosaic_0001>

<llo_original>
// kernel: tpu_custom_call.1
$region0: #{tpu_custom_call.1}
  #allocation0 [shape = 'u32[]', space=smem, size = 0x4, offset = 0x4, fixed_abs, tag = 'smem constant byte address 0x4 - core index']
  #allocation1 [shape = 'u32[144,128]{1,0:T(1,128)}', space=vmem, size = 0x12000, scoped, tag = 'internal scratch']
  %s0 = inlined_call_operand.hbm [shape: f32[16,128], index: 0, kind: input, shape index: {}]
  %s1 = inlined_call_operand.hbm [shape: f32[8,128], index: 1, kind: input, shape index: {}]
  %s2 = inlined_call_operand.hbm [shape: f32[16,128], index: 2, kind: output, shape index: {}]
  %s3 = sld [smem:[#allocation0]]
  $region49: #{tpu_custom_call.1} parent=0
    _
  %s5 = ssub.s32 1, %s3
  %s6 = scalar_select 0, %s5, %s3
  $region1: #{tpu_custom_call.1} parent=0
    #allocation2 [shape = 'u8[8192]{0}', space=vmem, size = 0x2000, scoped, tag = 'input window, operand 0']
    #allocation3 [shape = 's32[2]{0}', space=sflag, size = 0x8, scoped, tag = 'scoped memory for tpu_custom_call.1']
    #allocation4 [shape = 's32[2]{0}', space=sflag, size = 0x8, scoped, tag = 'scoped memory for tpu_custom_call.1']
    #allocation5 [shape = 'u8[4096]{0}', space=vmem, size = 0x1000, scoped, tag = 'input window, operand 1, single buffered']
    #allocation6 [shape = 's32[1]{0}', space=sflag, size = 0x4, scoped, tag = 'scoped memory for tpu_custom_call.1']
    #allocation7 [shape = 'u8[8192]{0}', space=vmem, size = 0x2000, scoped, tag = 'output window, operand 0']
    %7 = vsyncpa [#allocation3], 0
    %s8 = scalar_lea.sflag [#allocation3], 1
    %9 = vsyncpa %s8, 0
    %10 = vsyncpa [#allocation6], 0
    %11 = vsyncpa [#allocation4], 0
    %s12 = scalar_lea.sflag [#allocation4], 1
    %13 = vsyncpa %s12, 0
    loop: start=0, step=1, limit=4
    $region2: #{tpu_custom_call.1} parent=1 // loop_pre_header
      _
    $region3: #{tpu_custom_call.1} parent=1 // loop_header
      %s15 = sphi 0, %s19
      %p16 = scmp.ge.s32.totalorder %s15, 4
      %s25 = sphi 0, %s27
      %s28 = sphi 0, %s25
      %s29 = sphi 0, %s28
      %s45 = sphi 0, %s29
      %s49 = sphi 0, %s49
      %s51 = sphi 0, %s49
      %s52 = sphi 0, %s51
      %s66 = sphi 0, %s52
      %s72 = sphi 0, %s74
      %s75 = sphi 0, %s72
      %s76 = sphi 0, %s75
      %s92 = sphi 0, %s76
    $region4: #{tpu_custom_call.1} parent=1 // loop_header_branch
      %18 = sbr.rel (%p16) target = $region8
    $region5: #{tpu_custom_call.1} parent=1 // loop_body
      %s20 = ssub.s32 %s15, 1
      %s21 = ssub.s32 %s15, 2
      %s22 = sadd.s32 %s15, 1
      %s23 = ssub.s32 %s15, %s22
      %p24 = scmp.eq.s32.totalorder %s23, 0
      %s26 = sadd.s32 %s25, 1
      %s27 = scalar_select %p24, %s25, %s26
      %p30 = pneg %p24
      %p31 = scmp.eq.s32.totalorder %s15, 1
      %p32 = por %p30, %p31
      %p33 = scmp.ne.s32.totalorder %s25, %s28
      %p34 = scmp.eq.s32.totalorder %s15, 0
      %p35 = por %p33, %p34
      %p36 = scmp.ne.s32.totalorder %s25, %s28
      %p37 = scmp.eq.s32.totalorder %s20, 1
      %p38 = por %p36, %p37
      %p39 = scmp.ne.s32.totalorder %s28, %s29
      %p40 = scmp.eq.s32.totalorder %s20, 0
      %p41 = por %p39, %p40
      %p42 = scmp.ne.s32.totalorder %s28, %s29
      %p43 = scmp.eq.s32.totalorder %s21, 1
      %p44 = por %p42, %p43
      %p46 = scmp.ne.s32.totalorder %s29, %s45
      %p47 = scmp.eq.s32.totalorder %s21, 0
      %p48 = por %p46, %p47
      %s50 = sadd.s32 %s49, 1
      %p53 = scmp.eq.s32.totalorder %s15, 1
      %p54 = scmp.ne.s32.totalorder %s49, %s51
      %p55 = scmp.eq.s32.totalorder %s15, 0
      %p56 = por %p54, %p55
      %p57 = scmp.ne.s32.totalorder %s49, %s51
      %p58 = scmp.eq.s32.totalorder %s20, 1
      %p59 = por %p57, %p58
      %p60 = scmp.ne.s32.totalorder %s51, %s52
      %p61 = scmp.eq.s32.totalorder %s20, 0
      %p62 = por %p60, %p61
      %p63 = scmp.ne.s32.totalorder %s51, %s52
      %p64 = scmp.eq.s32.totalorder %s21, 1
      %p65 = por %p63, %p64
      %p67 = scmp.ne.s32.totalorder %s52, %s66
      %p68 = scmp.eq.s32.totalorder %s21, 0
      %p69 = por %p67, %p68
      %s70 = ssub.s32 %s15, %s22
      %p71 = scmp.eq.s32.totalorder %s70, 0
      %s73 = sadd.s32 %s72, 1
      %s74 = scalar_select %p71, %s72, %s73
      %p77 = pneg %p71
      %p78 = scmp.eq.s32.totalorder %s15, 1
      %p79 = por %p77, %p78
      %p80 = scmp.ne.s32.totalorder %s72, %s75
      %p81 = scmp.eq.s32.totalorder %s15, 0
      %p82 = por %p80, %p81
      %p83 = scmp.ne.s32.totalorder %s72, %s75
      %p84 = scmp.eq.s32.totalorder %s20, 1
      %p85 = por %p83, %p84
      %p86 = scmp.ne.s32.totalorder %s75, %s76
      %p87 = scmp.eq.s32.totalorder %s20, 0
      %p88 = por %p86, %p87
      %p89 = scmp.ne.s32.totalorder %s75, %s76
      %p90 = scmp.eq.s32.totalorder %s21, 1
      %p91 = por %p89, %p90
      %p93 = scmp.ne.s32.totalorder %s76, %s92
      %p94 = scmp.eq.s32.totalorder %s21, 0
      %p95 = por %p93, %p94
      %p96 = scmp.le.s32.totalorder 1, %s15
      %p97 = scmp.lt.s32.totalorder %s15, 3
      %p98 = pnand %p96, %p97
      %p99 = pneg %p98
      // Predicated region
      $region9: #{tpu_custom_call.1} parent=5 // pred_check
        _
      $region10: #{tpu_custom_call.1} parent=5 // pred_check_branch
        %101 = sbr.rel (%p98) target = $region12
      $region11: #{tpu_custom_call.1} parent=5 // pred_region
        %s102 = ssub.s32 %s15, 1
        // Predicated region
        $region13: #{tpu_custom_call.1} parent=11 // pred_check
          %p103 = pneg %p62
        $region14: #{tpu_custom_call.1} parent=11 // pred_check_branch
          %105 = sbr.rel (%p103) target = $region16
        $region15: #{tpu_custom_call.1} parent=11 // pred_region
          %s107 = ssub.s32 128, 128
          %108 = vsyncadd [#allocation6], %s107
          %s110 = sshll.u32 [#allocation5], 4
          %s111 = int_to_ptr.vmem [resolvable:$true] %s110
          %113 = dma.hbm_to_vmem [thread:$0]  %s1, 128, %s111, [#allocation6]
        $region16: #{tpu_custom_call.1} parent=11 // pred_fallthru
          _
      $region12: #{tpu_custom_call.1} parent=5 // pred_fallthru
        _
      %p114 = scmp.lt.s32.totalorder %s15, 2
      // Predicated region
      $region17: #{tpu_custom_call.1} parent=5 // pred_check
        %p115 = pneg %p114
      $region18: #{tpu_custom_call.1} parent=5 // pred_check_branch
        %117 = sbr.rel (%p115) target = $region20
      $region19: #{tpu_custom_call.1} parent=5 // pred_region
        // Predicated region
        $region21: #{tpu_custom_call.1} parent=19 // pred_check
          %p118 = pneg %p35
        $region22: #{tpu_custom_call.1} parent=19 // pred_check_branch
          %120 = sbr.rel (%p118) target = $region24
        $region23: #{tpu_custom_call.1} parent=19 // pred_region
          %s121 = sand.u32 %s25, 1
          %s122 = scalar_lea.sflag [#allocation3], %s121
          %s123 = sand.u32 %s25, 1
          %s124 = smul.addr %s123, 8
          %s125 = scalar_lea.vmem [#allocation2], %s124
          %s127 = ssub.s32 128, 128
          %128 = vsyncadd %s122, %s127
          %s129 = smul.addr %s15, 128
          %s130 = scalar_lea.hbm %s0, %s129
          %s132 = sshll.u32 %s125, 4
          %s133 = int_to_ptr.vmem [resolvable:$true] %s132
          %135 = dma.hbm_to_vmem [thread:$0]  %s130, 128, %s133, %s122
        $region24: #{tpu_custom_call.1} parent=19 // pred_fallthru
          _
      $region20: #{tpu_custom_call.1} parent=5 // pred_fallthru
        _
      %p136 = scmp.le.s32.totalorder 1, %s15
      %p137 = scmp.lt.s32.totalorder %s15, 3
      %p138 = pnand %p136, %p137
      %p139 = pneg %p138
      // Predicated region
      $region25: #{tpu_custom_call.1} parent=5 // pred_check
        _
      $region26: #{tpu_custom_call.1} parent=5 // pred_check_branch
        %141 = sbr.rel (%p138) target = $region28
      $region27: #{tpu_custom_call.1} parent=5 // pred_region
        %s142 = ssub.s32 %s15, 1
        %s143 = sand.u32 %s28, 1
        %s144 = scalar_lea.sflag [#allocation3], %s143
        %s145 = sand.u32 %s28, 1
        %s146 = smul.addr %s145, 8
        %s147 = scalar_lea.vmem [#allocation2], %s146
        // Predicated region
        $region29: #{tpu_custom_call.1} parent=27 // pred_check
          %p148 = pneg %p41
        $region30: #{tpu_custom_call.1} parent=27 // pred_check_branch
          %150 = sbr.rel (%p148) target = $region32
        $region31: #{tpu_custom_call.1} parent=27 // pred_region
          %151 = dma.done %s144, 128
        $region32: #{tpu_custom_call.1} parent=27 // pred_fallthru
          _
        // Predicated region
        $region33: #{tpu_custom_call.1} parent=27 // pred_check
          %p152 = pneg %p62
        $region34: #{tpu_custom_call.1} parent=27 // pred_check_branch
          %154 = sbr.rel (%p152) target = $region36
        $region35: #{tpu_custom_call.1} parent=27 // pred_region
          %155 = dma.done [#allocation6], 128
        $region36: #{tpu_custom_call.1} parent=27 // pred_fallthru
          _
        %s156 = sand.u32 %s28, 1
        %s157 = scalar_lea.sflag [#allocation3], %s156
        %s158 = sand.u32 %s28, 1
        %s159 = smul.addr %s158, 8
        %s160 = scalar_lea.vmem [#allocation2], %s159
        %p161 = pneg %p41
        %p162 = pneg %p38
        %p163 = pneg %p62
        %p164 = pneg %p59
        %p165 = pneg %p88
        %p166 = pneg %p85
        %s167 = sand.u32 %s75, 1
        %s168 = scalar_lea.sflag [#allocation4], %s167
        %s169 = sand.u32 %s75, 1
        %s170 = smul.addr %s169, 8
        %s171 = scalar_lea.vmem [#allocation7], %s170
        %v172 = vld [vmem:[%s147] sm:$0xff]
        %v173 = vld [vmem:[#allocation5] sm:$0xff]
        %v174 = vadd.f32 %v172, %v173
        %175 = vst [vmem:[%s171] sm:$0xff] %v174
        %s176 = sand.u32 %s75, 1
        %s177 = scalar_lea.sflag [#allocation4], %s176
        %s178 = sand.u32 %s75, 1
        %s179 = smul.addr %s178, 8
        %s180 = scalar_lea.vmem [#allocation7], %s179
        // Predicated region
        $region37: #{tpu_custom_call.1} parent=27 // pred_check
          %p181 = pneg %p85
        $region38: #{tpu_custom_call.1} parent=27 // pred_check_branch
          %183 = sbr.rel (%p181) target = $region40
        $region39: #{tpu_custom_call.1} parent=27 // pred_region
          %s185 = ssub.s32 128, 128
          %186 = vsyncadd %s177, %s185
          %s187 = smul.addr %s20, 128
          %s188 = scalar_lea.hbm %s2, %s187
          %s190 = sshll.u32 %s180, 4
          %s191 = int_to_ptr.vmem [resolvable:$true] %s190
          %193 = dma.vmem_to_hbm [thread:$0]  %s191, 128, %s188, %s177
        $region40: #{tpu_custom_call.1} parent=27 // pred_fallthru
          _
      $region28: #{tpu_custom_call.1} parent=5 // pred_fallthru
        _
      %p194 = scmp.le.s32.totalorder 2, %s15
      // Predicated region
      $region41: #{tpu_custom_call.1} parent=5 // pred_check
        %p195 = pneg %p194
      $region42: #{tpu_custom_call.1} parent=5 // pred_check_branch
        %197 = sbr.rel (%p195) target = $region44
      $region43: #{tpu_custom_call.1} parent=5 // pred_region
        %s198 = ssub.s32 %s15, 2
        // Predicated region
        $region45: #{tpu_custom_call.1} parent=43 // pred_check
          %p199 = pneg %p91
        $region46: #{tpu_custom_call.1} parent=43 // pred_check_branch
          %201 = sbr.rel (%p199) target = $region48
        $region47: #{tpu_custom_call.1} parent=43 // pred_region
          %s202 = sand.u32 %s76, 1
          %s203 = scalar_lea.sflag [#allocation4], %s202
          %s204 = sand.u32 %s76, 1
          %s205 = smul.addr %s204, 8
          %s206 = scalar_lea.vmem [#allocation7], %s205
          %207 = dma.done %s203, 128
        $region48: #{tpu_custom_call.1} parent=43 // pred_fallthru
          _
      $region44: #{tpu_custom_call.1} parent=5 // pred_fallthru
        _
    $region6: #{tpu_custom_call.1} parent=1 // loop_footer
      %s19 = sadd.s32 1, %s15
    $region7: #{tpu_custom_call.1} parent=1 // loop_footer_branch
      %14 = sbr.rel target = $region3
    $region8: #{tpu_custom_call.1} parent=1 // loop_exit
      _
    %208 = vsyncpa [#allocation3], 1
    %s209 = scalar_lea.sflag [#allocation3], 1
    %210 = vsyncpa %s209, 1
    %211 = vsyncpa [#allocation6], 1
    %212 = vsyncpa [#allocation4], 1
    %s213 = scalar_lea.sflag [#allocation4], 1
    %214 = vsyncpa %s213, 1

// kernel: tpu_custom_call.1
$region0: #{tpu_custom_call.1}
  #allocation0 [shape = 'u32[]', space=smem, size = 0x4, offset = 0x4, fixed_abs, tag = 'smem constant byte address 0x4 - core index']
  #allocation1 [shape = 'u32[144,128]{1,0:T(1,128)}', space=vmem, size = 0x12000, scoped, tag = 'internal scratch']
  %s0 = inlined_call_operand.hbm [shape: bf16[128,128], index: 0, kind: input, shape index: {}]
  %s1 = inlined_call_operand.hbm [shape: bf16[128,128], index: 1, kind: input, shape index: {}]
  %s2 = inlined_call_operand.hbm [shape: bf16[128,128], index: 2, kind: output, shape index: {}]
  %s3 = sld [smem:[#allocation0]]
  $region49: #{tpu_custom_call.1} parent=0
    _
  %s5 = ssub.s32 1, %s3
  %s6 = scalar_select 0, %s5, %s3
  $region1: #{tpu_custom_call.1} parent=0
    #allocation2 [shape = 'u8[4096]{0}', space=vmem, size = 0x1000, scoped, tag = 'input window, operand 0']
    #allocation3 [shape = 's32[2]{0}', space=sflag, size = 0x8, scoped, tag = 'scoped memory for tpu_custom_call.1']
    #allocation4 [shape = 's32[2]{0}', space=sflag, size = 0x8, scoped, tag = 'scoped memory for tpu_custom_call.1']
    #allocation5 [shape = 'u8[32768]{0}', space=vmem, size = 0x8000, scoped, tag = 'input window, operand 1, single buffered']
    #allocation6 [shape = 's32[1]{0}', space=sflag, size = 0x4, scoped, tag = 'scoped memory for tpu_custom_call.1']
    #allocation7 [shape = 'u8[4096]{0}', space=vmem, size = 0x1000, scoped, tag = 'output window, operand 0']
    %7 = vsyncpa [#allocation3], 0
    %s8 = scalar_lea.sflag [#allocation3], 1
    %9 = vsyncpa %s8, 0
    %10 = vsyncpa [#allocation6], 0
    %11 = vsyncpa [#allocation4], 0
    %s12 = scalar_lea.sflag [#allocation4], 1
    %13 = vsyncpa %s12, 0
    loop: start=0, step=1, limit=18
    $region2: #{tpu_custom_call.1} parent=1 // loop_pre_header
      _
    $region3: #{tpu_custom_call.1} parent=1 // loop_header
      %s15 = sphi 0, %s19
      %p16 = scmp.ge.s32.totalorder %s15, 18
      %s25 = sphi 0, %s27
      %s28 = sphi 0, %s25
      %s29 = sphi 0, %s28
      %s45 = sphi 0, %s29
      %s49 = sphi 0, %s49
      %s51 = sphi 0, %s49
      %s52 = sphi 0, %s51
      %s66 = sphi 0, %s52
      %s72 = sphi 0, %s74
      %s75 = sphi 0, %s72
      %s76 = sphi 0, %s75
      %s92 = sphi 0, %s76
    $region4: #{tpu_custom_call.1} parent=1 // loop_header_branch
      %18 = sbr.rel (%p16) target = $region8
    $region5: #{tpu_custom_call.1} parent=1 // loop_body
      %s20 = ssub.s32 %s15, 1
      %s21 = ssub.s32 %s15, 2
      %s22 = sadd.s32 %s15, 1
      %s23 = ssub.s32 %s15, %s22
      %p24 = scmp.eq.s32.totalorder %s23, 0
      %s26 = sadd.s32 %s25, 1
      %s27 = scalar_select %p24, %s25, %s26
      %p30 = pneg %p24
      %p31 = scmp.eq.s32.totalorder %s15, 15
      %p32 = por %p30, %p31
      %p33 = scmp.ne.s32.totalorder %s25, %s28
      %p34 = scmp.eq.s32.totalorder %s15, 0
      %p35 = por %p33, %p34
      %p36 = scmp.ne.s32.totalorder %s25, %s28
      %p37 = scmp.eq.s32.totalorder %s20, 15
      %p38 = por %p36, %p37
      %p39 = scmp.ne.s32.totalorder %s28, %s29
      %p40 = scmp.eq.s32.totalorder %s20, 0
      %p41 = por %p39, %p40
      %p42 = scmp.ne.s32.totalorder %s28, %s29
      %p43 = scmp.eq.s32.totalorder %s21, 15
      %p44 = por %p42, %p43
      %p46 = scmp.ne.s32.totalorder %s29, %s45
      %p47 = scmp.eq.s32.totalorder %s21, 0
      %p48 = por %p46, %p47
      %s50 = sadd.s32 %s49, 1
      %p53 = scmp.eq.s32.totalorder %s15, 15
      %p54 = scmp.ne.s32.totalorder %s49, %s51
      %p55 = scmp.eq.s32.totalorder %s15, 0
      %p56 = por %p54, %p55
      %p57 = scmp.ne.s32.totalorder %s49, %s51
      %p58 = scmp.eq.s32.totalorder %s20, 15
      %p59 = por %p57, %p58
      %p60 = scmp.ne.s32.totalorder %s51, %s52
      %p61 = scmp.eq.s32.totalorder %s20, 0
      %p62 = por %p60, %p61
      %p63 = scmp.ne.s32.totalorder %s51, %s52
      %p64 = scmp.eq.s32.totalorder %s21, 15
      %p65 = por %p63, %p64
      %p67 = scmp.ne.s32.totalorder %s52, %s66
      %p68 = scmp.eq.s32.totalorder %s21, 0
      %p69 = por %p67, %p68
      %s70 = ssub.s32 %s15, %s22
      %p71 = scmp.eq.s32.totalorder %s70, 0
      %s73 = sadd.s32 %s72, 1
      %s74 = scalar_select %p71, %s72, %s73
      %p77 = pneg %p71
      %p78 = scmp.eq.s32.totalorder %s15, 15
      %p79 = por %p77, %p78
      %p80 = scmp.ne.s32.totalorder %s72, %s75
      %p81 = scmp.eq.s32.totalorder %s15, 0
      %p82 = por %p80, %p81
      %p83 = scmp.ne.s32.totalorder %s72, %s75
      %p84 = scmp.eq.s32.totalorder %s20, 15
      %p85 = por %p83, %p84
      %p86 = scmp.ne.s32.totalorder %s75, %s76
      %p87 = scmp.eq.s32.totalorder %s20, 0
      %p88 = por %p86, %p87
      %p89 = scmp.ne.s32.totalorder %s75, %s76
      %p90 = scmp.eq.s32.totalorder %s21, 15
      %p91 = por %p89, %p90
      %p93 = scmp.ne.s32.totalorder %s76, %s92
      %p94 = scmp.eq.s32.totalorder %s21, 0
      %p95 = por %p93, %p94
      %p96 = scmp.le.s32.totalorder 1, %s15
      %p97 = scmp.lt.s32.totalorder %s15, 17
      %p98 = pnand %p96, %p97
      %p99 = pneg %p98
      // Predicated region
      $region9: #{tpu_custom_call.1} parent=5 // pred_check
        _
      $region10: #{tpu_custom_call.1} parent=5 // pred_check_branch
        %101 = sbr.rel (%p98) target = $region12
      $region11: #{tpu_custom_call.1} parent=5 // pred_region
        %s102 = ssub.s32 %s15, 1
        // Predicated region
        $region13: #{tpu_custom_call.1} parent=11 // pred_check
          %p103 = pneg %p62
        $region14: #{tpu_custom_call.1} parent=11 // pred_check_branch
          %105 = sbr.rel (%p103) target = $region16
        $region15: #{tpu_custom_call.1} parent=11 // pred_region
          %s107 = ssub.s32 1024, 1024
          %108 = vsyncadd [#allocation6], %s107
          %s109 = sshll.u32 [#allocation5], 4
          %s110 = int_to_ptr.vmem [resolvable:$true] %s109
          %115 = dma.hbm_to_vmem [thread:$0]  %s1, 1024, %s110, [#allocation6], 64, 64, 4
        $region16: #{tpu_custom_call.1} parent=11 // pred_fallthru
          _
      $region12: #{tpu_custom_call.1} parent=5 // pred_fallthru
        _
      %p116 = scmp.lt.s32.totalorder %s15, 16
      // Predicated region
      $region17: #{tpu_custom_call.1} parent=5 // pred_check
        %p117 = pneg %p116
      $region18: #{tpu_custom_call.1} parent=5 // pred_check_branch
        %119 = sbr.rel (%p117) target = $region20
      $region19: #{tpu_custom_call.1} parent=5 // pred_region
        // Predicated region
        $region21: #{tpu_custom_call.1} parent=19 // pred_check
          %p120 = pneg %p35
        $region22: #{tpu_custom_call.1} parent=19 // pred_check_branch
          %122 = sbr.rel (%p120) target = $region24
        $region23: #{tpu_custom_call.1} parent=19 // pred_region
          %s123 = sand.u32 %s25, 1
          %s124 = scalar_lea.sflag [#allocation3], %s123
          %s125 = sand.u32 %s25, 1
          %s126 = smul.addr %s125, 4
          %s127 = scalar_lea.vmem [#allocation2], %s126
          %s129 = ssub.s32 64, 64
          %130 = vsyncadd %s124, %s129
          %s131 = smul.addr %s15, 64
          %s132 = scalar_lea.hbm %s0, %s131
          %s134 = sshll.u32 %s127, 4
          %s135 = int_to_ptr.vmem [resolvable:$true] %s134
          %137 = dma.hbm_to_vmem [thread:$0]  %s132, 64, %s135, %s124
        $region24: #{tpu_custom_call.1} parent=19 // pred_fallthru
          _
      $region20: #{tpu_custom_call.1} parent=5 // pred_fallthru
        _
      %p138 = scmp.le.s32.totalorder 1, %s15
      %p139 = scmp.lt.s32.totalorder %s15, 17
      %p140 = pnand %p138, %p139
      %p141 = pneg %p140
      // Predicated region
      $region25: #{tpu_custom_call.1} parent=5 // pred_check
        _
      $region26: #{tpu_custom_call.1} parent=5 // pred_check_branch
        %143 = sbr.rel (%p140) target = $region28
      $region27: #{tpu_custom_call.1} parent=5 // pred_region
        %s144 = ssub.s32 %s15, 1
        %s145 = sand.u32 %s28, 1
        %s146 = scalar_lea.sflag [#allocation3], %s145
        %s147 = sand.u32 %s28, 1
        %s148 = smul.addr %s147, 4
        %s149 = scalar_lea.vmem [#allocation2], %s148
        // Predicated region
        $region29: #{tpu_custom_call.1} parent=27 // pred_check
          %p150 = pneg %p41
        $region30: #{tpu_custom_call.1} parent=27 // pred_check_branch
          %152 = sbr.rel (%p150) target = $region32
        $region31: #{tpu_custom_call.1} parent=27 // pred_region
          %153 = dma.done %s146, 64
        $region32: #{tpu_custom_call.1} parent=27 // pred_fallthru
          _
        // Predicated region
        $region33: #{tpu_custom_call.1} parent=27 // pred_check
          %p154 = pneg %p62
        $region34: #{tpu_custom_call.1} parent=27 // pred_check_branch
          %156 = sbr.rel (%p154) target = $region36
        $region35: #{tpu_custom_call.1} parent=27 // pred_region
          %157 = dma.done [#allocation6], 1024
        $region36: #{tpu_custom_call.1} parent=27 // pred_fallthru
          _
        %s158 = sand.u32 %s28, 1
        %s159 = scalar_lea.sflag [#allocation3], %s158
        %s160 = sand.u32 %s28, 1
        %s161 = smul.addr %s160, 4
        %s162 = scalar_lea.vmem [#allocation2], %s161
        %p163 = pneg %p41
        %p164 = pneg %p38
        %p165 = pneg %p62
        %p166 = pneg %p59
        %p167 = pneg %p88
        %p168 = pneg %p85
        %s169 = sand.u32 %s75, 1
        %s170 = scalar_lea.sflag [#allocation4], %s169
        %s171 = sand.u32 %s75, 1
        %s172 = smul.addr %s171, 4
        %s173 = scalar_lea.vmem [#allocation7], %s172
        %v175 = vld [vmem:[%s149] sm:$0xf]
        %v176 = vld [vmem:[#allocation5] sm:$0xf]
        %v177 = vld [vmem:[#allocation5 + $0x4] sm:$0xf]
        %v178 = vld [vmem:[#allocation5 + $0x8] sm:$0xf]
        %v179 = vld [vmem:[#allocation5 + $0xc] sm:$0xf]
        %v180 = vld [vmem:[#allocation5 + $0x10] sm:$0xf]
        %v181 = vld [vmem:[#allocation5 + $0x14] sm:$0xf]
        %v182 = vld [vmem:[#allocation5 + $0x18] sm:$0xf]
        %v183 = vld [vmem:[#allocation5 + $0x1c] sm:$0xf]
        %v184 = vld [vmem:[#allocation5 + $0x20] sm:$0xf]
        %v185 = vld [vmem:[#allocation5 + $0x24] sm:$0xf]
        %v186 = vld [vmem:[#allocation5 + $0x28] sm:$0xf]
        %v187 = vld [vmem:[#allocation5 + $0x2c] sm:$0xf]
        %v188 = vld [vmem:[#allocation5 + $0x30] sm:$0xf]
        %v189 = vld [vmem:[#allocation5 + $0x34] sm:$0xf]
        %v190 = vld [vmem:[#allocation5 + $0x38] sm:$0xf]
        %v191 = vld [vmem:[#allocation5 + $0x3c] sm:$0xf]
        %v208 = vunpack.c.l.b16 %v176
        %v209 = vunpack.c.l.b16 %v177
        %v210 = vunpack.c.l.b16 %v178
        %v211 = vunpack.c.l.b16 %v179
        %v212 = vunpack.c.l.b16 %v180
        %v213 = vunpack.c.l.b16 %v181
        %v214 = vunpack.c.l.b16 %v182
        %v215 = vunpack.c.l.b16 %v183
        %v216 = vunpack.c.l.b16 %v184
        %v217 = vunpack.c.l.b16 %v185
        %v218 = vunpack.c.l.b16 %v186
        %v219 = vunpack.c.l.b16 %v187
        %v220 = vunpack.c.l.b16 %v188
        %v221 = vunpack.c.l.b16 %v189
        %v222 = vunpack.c.l.b16 %v190
        %v223 = vunpack.c.l.b16 %v191
        %v224 = vpack.c.b16 %v209, %v208
        %v225 = vpack.c.b16 %v211, %v210
        %v226 = vpack.c.b16 %v213, %v212
        %v227 = vpack.c.b16 %v215, %v214
        %v228 = vpack.c.b16 %v217, %v216
        %v229 = vpack.c.b16 %v219, %v218
        %v230 = vpack.c.b16 %v221, %v220
        %v231 = vpack.c.b16 %v223, %v222
        %240 = vmatprep.subr.bf16.mxu0 0
        %241 = vmatpush1.bf16.msra.mxu0 %v224
        %242 = vmatprep.subr.bf16.mxu0 0
        %243 = vmatpush1.bf16.msra.mxu0 %v225
        %244 = vmatprep.subr.bf16.mxu0 0
        %245 = vmatpush1.bf16.msra.mxu0 %v226
        %246 = vmatprep.subr.bf16.mxu0 0
        %247 = vmatpush1.bf16.msra.mxu0 %v227
        %248 = vmatprep.subr.bf16.mxu0 0
        %249 = vmatpush1.bf16.msra.mxu0 %v228
        %250 = vmatprep.subr.bf16.mxu0 0
        %251 = vmatpush1.bf16.msra.mxu0 %v229
        %252 = vmatprep.subr.bf16.mxu0 0
        %253 = vmatpush1.bf16.msra.mxu0 %v230
        %254 = vmatprep.subr.bf16.mxu0 0
        %255 = vmatpush1.bf16.msra.mxu0 %v231
        %256 = vmatprep.subr.bf16.mxu0 0
        %257 = vmatpush1.bf16.msra.mxu0 0
        %258 = vmatprep.subr.bf16.mxu0 0
        %259 = vmatpush1.bf16.msra.mxu0 0
        %260 = vmatprep.subr.bf16.mxu0 0
        %261 = vmatpush1.bf16.msra.mxu0 0
        %262 = vmatprep.subr.bf16.mxu0 0
        %263 = vmatpush1.bf16.msra.mxu0 0
        %264 = vmatprep.subr.bf16.mxu0 0
        %265 = vmatpush1.bf16.msra.mxu0 0
        %266 = vmatprep.subr.bf16.mxu0 0
        %267 = vmatpush1.bf16.msra.mxu0 0
        %268 = vmatprep.subr.bf16.mxu0 0
        %269 = vmatpush1.bf16.msra.mxu0 0
        %270 = vmatprep.subr.bf16.mxu0 0
        %271 = vmatpush1.bf16.msra.mxu0 0
        %272 = vmatprep.mubr.bf16.mxu0 0
        %273 = vmatmul.mubr.bf16.gmra.mrb[0].mxu0 %v175
        %v274 = vpop.f32.mrb[0].mxu0
        %v275 = vadd.f32 0.0, %v274
        %v276 = vpop.f32.mrb[0].mxu0
        %v277 = vpop.f32.mrb[0].mxu0
        %v278 = vpop.f32.mrb[0].mxu0
        %279 = vdwg.mxu0
        %v280 = vmax.f32 %v275, 0.0
        %v281 = vmul.f32 %v280, %v280
        %282 = vadd.xlane.f32.xlu0 %v281
        %v283 = vpop.xlane.xlu0 %282
        %v284 = vadd.f32 %v283, 1.0
        %v285 = vrsqrt.pop %v284
        %v286 = vmul.f32 %v284, %v285
        %vm287 = vcmp.eq.f32.partialorder %v284, inf
        %v288 = vsel %vm287, %v284, %v286
        %vm289 = vcmp.eq.f32.partialorder %v284, 0.0
        %v290 = vand.u32 %v284, 2147483648
        %v291 = vsel %vm289, %v290, %v288
        %v292 = vlaneseq
        %v293 = vand.u32 %v292, 127
        %vm294 = vcmp.eq.s32.totalorder %v293, 0
        %v295 = vsel %vm294, %v291, %v280
        %v296 = vpack.c.bf16 %v295, %v295
        %297 = vst [vmem:[%s173] sm:$0xf] %v296
        %s298 = sand.u32 %s75, 1
        %s299 = scalar_lea.sflag [#allocation4], %s298
        %s300 = sand.u32 %s75, 1
        %s301 = smul.addr %s300, 4
        %s302 = scalar_lea.vmem [#allocation7], %s301
        // Predicated region
        $region37: #{tpu_custom_call.1} parent=27 // pred_check
          %p303 = pneg %p85
        $region38: #{tpu_custom_call.1} parent=27 // pred_check_branch
          %305 = sbr.rel (%p303) target = $region40
        $region39: #{tpu_custom_call.1} parent=27 // pred_region
          %s307 = ssub.s32 64, 64
          %308 = vsyncadd %s299, %s307
          %s309 = smul.addr %s20, 64
          %s310 = scalar_lea.hbm %s2, %s309
          %s312 = sshll.u32 %s302, 4
          %s313 = int_to_ptr.vmem [resolvable:$true] %s312
          %315 = dma.vmem_to_hbm [thread:$0]  %s313, 64, %s310, %s299
        $region40: #{tpu_custom_call.1} parent=27 // pred_fallthru
          _
      $region28: #{tpu_custom_call.1} parent=5 // pred_fallthru
        _
      %p316 = scmp.le.s32.totalorder 2, %s15
      // Predicated region
      $region41: #{tpu_custom_call.1} parent=5 // pred_check
        %p317 = pneg %p316
      $region42: #{tpu_custom_call.1} parent=5 // pred_check_branch
        %319 = sbr.rel (%p317) target = $region44
      $region43: #{tpu_custom_call.1} parent=5 // pred_region
        %s320 = ssub.s32 %s15, 2
        // Predicated region
        $region45: #{tpu_custom_call.1} parent=43 // pred_check
          %p321 = pneg %p91
        $region46: #{tpu_custom_call.1} parent=43 // pred_check_branch
          %323 = sbr.rel (%p321) target = $region48
        $region47: #{tpu_custom_call.1} parent=43 // pred_region
          %s324 = sand.u32 %s76, 1
          %s325 = scalar_lea.sflag [#allocation4], %s324
          %s326 = sand.u32 %s76, 1
          %s327 = smul.addr %s326, 4
          %s328 = scalar_lea.vmem [#allocation7], %s327
          %329 = dma.done %s325, 64
        $region48: #{tpu_custom_call.1} parent=43 // pred_fallthru
          _
      $region44: #{tpu_custom_call.1} parent=5 // pred_fallthru
        _
    $region6: #{tpu_custom_call.1} parent=1 // loop_footer
      %s19 = sadd.s32 1, %s15
    $region7: #{tpu_custom_call.1} parent=1 // loop_footer_branch
      %14 = sbr.rel target = $region3
    $region8: #{tpu_custom_call.1} parent=1 // loop_exit
      _
    %330 = vsyncpa [#allocation3], 1
    %s331 = scalar_lea.sflag [#allocation3], 1
    %332 = vsyncpa %s331, 1
    %333 = vsyncpa [#allocation6], 1
    %334 = vsyncpa [#allocation4], 1
    %s335 = scalar_lea.sflag [#allocation4], 1
    %336 = vsyncpa %s335, 1

</llo_original>
